<compile_context>
chip_gen: v5e
topology: v5e:2x2
jax: 0.10.0
libtpu: 0.0.40
codegen_flags: <defaults>
</compile_context>

<pallas_src>
import numpy as np
import jax
import jax.numpy as jnp
from jax.experimental import pallas as pl
from jax.experimental.pallas import tpu as pltpu

PAD = 8          # sublane padding for the stacked QA projection (row0=start, row1=end)
IGNORE = -100    # torch CrossEntropyLoss default ignore_index


def chaii_model_load_head(x, w1, b1, ws, we, bqa, start_positions, end_positions):
    """Returns (start_logits [B,S], end_logits [B,S], loss [1,1])."""
    B, S, H = x.shape
    f32, bf16 = jnp.float32, jnp.bfloat16

    # ---- wrapper-side layout plumbing only (no transpose of the big activation) ----
    x_tok = x.reshape(B * S, H).astype(bf16)                      # [B*S, H] token-major
    w1b = jnp.asarray(w1, f32).astype(bf16)                       # [H, H]
    b1r = jnp.asarray(b1, f32).reshape(1, H)                      # [1, H]
    wqa = jnp.concatenate(
        [jnp.asarray(ws, f32), jnp.asarray(we, f32),
         jnp.zeros((PAD - 2, H), f32)], axis=0).astype(bf16)      # [8, H]
    bqa8 = jnp.concatenate(
        [jnp.asarray(bqa, f32).reshape(2, 1),
         jnp.zeros((PAD - 2, 1), f32)], axis=0)                   # [8, 1]
    pos = jnp.concatenate(
        [start_positions.reshape(B, 1).astype(jnp.int32),
         end_positions.reshape(B, 1).astype(jnp.int32)], axis=1)  # [B, 2] -> SMEM

    def kernel(pos_ref, x_ref, w1_ref, b1_ref, wqa_ref, bqa_ref,
               logits_ref, loss_ref, ce_acc, cnt_acc):
        i = pl.program_id(0)

        # ---- stand-in transformer: token-major MXU matmul (bf16 in, f32 acc) ----
        h = jnp.tanh(
            jnp.dot(x_ref[...], w1_ref[...], preferred_element_type=jnp.float32)
            + b1_ref[...])                                                # [S, H] f32

        # ---- fused start/end QA projection -> lane-dense [8, S] slab ----
        logits8 = jax.lax.dot_general(
            wqa_ref[...], h.astype(jnp.bfloat16),
            dimension_numbers=(((1,), (1,)), ((), ())),
            preferred_element_type=jnp.float32) + bqa_ref[...]            # [8, S]
        logits_ref[...] = logits8[0:2, :]                                 # single dense store

        # ---- CrossEntropy partials for this example (rows: 0=start, 1=end) ----
        sp = pos_ref[i, 0]
        ep = pos_ref[i, 1]
        row = jax.lax.broadcasted_iota(jnp.int32, (PAD, 1), 0)
        tgt = jnp.where(row == 0, sp, jnp.where(row == 1, ep, IGNORE))    # [8, 1]
        col = jax.lax.broadcasted_iota(jnp.int32, (PAD, S), 1)

        m = jnp.max(logits8, axis=-1, keepdims=True)                      # [8, 1]
        lse = m + jnp.log(jnp.sum(jnp.exp(logits8 - m), axis=-1, keepdims=True))
        pick = jnp.sum(jnp.where(col == tgt, logits8, 0.0),
                       axis=-1, keepdims=True)                            # [8, 1]
        valid = jnp.logical_and(tgt >= 0, tgt < S).astype(jnp.float32)    # ignore_index / OOB

        @pl.when(i == 0)
        def _():
            ce_acc[...] = jnp.zeros_like(ce_acc)
            cnt_acc[...] = jnp.zeros_like(cnt_acc)

        ce_acc[...] += valid * (lse - pick)
        cnt_acc[...] += valid

        @pl.when(i == pl.num_programs(0) - 1)
        def _():
            mean_ce = ce_acc[...] / cnt_acc[...]   # 0/0 -> NaN like torch's all-ignored case
            loss_ref[...] = jnp.sqrt(mean_ce[0:1, :] * mean_ce[1:2, :])

    cost = pl.CostEstimate(
        flops=2 * B * S * H * H + 2 * B * S * PAD * H,
        transcendentals=B * S * H + PAD * B * S,
        bytes_accessed=(B * S * H * 2 + H * H * 2 + PAD * H * 2 + H * 4
                        + PAD * 4 + B * 2 * 4 + 2 * B * S * 4 + 4),
    )

    logits2, loss = pl.pallas_call(
        kernel,
        grid=(B,),
        in_specs=[
            pl.BlockSpec(memory_space=pltpu.MemorySpace.SMEM),   # positions (scalar path)
            pl.BlockSpec((S, H), lambda i: (i, 0)),              # streamed activation tile
            pl.BlockSpec((H, H), lambda i: (0, 0)),              # resident weights (DMA'd once)
            pl.BlockSpec((1, H), lambda i: (0, 0)),
            pl.BlockSpec((PAD, H), lambda i: (0, 0)),
            pl.BlockSpec((PAD, 1), lambda i: (0, 0)),
        ],
        out_specs=(
            pl.BlockSpec((2, S), lambda i: (0, i)),              # lane-dense logits slab
            pl.BlockSpec((1, 1), lambda i: (0, 0)),              # total loss (written last step)
        ),
        out_shape=(
            jax.ShapeDtypeStruct((2, B * S), jnp.float32),
            jax.ShapeDtypeStruct((1, 1), jnp.float32),
        ),
        scratch_shapes=[
            pltpu.VMEM((PAD, 1), jnp.float32),   # sum over examples of (lse - picked)
            pltpu.VMEM((PAD, 1), jnp.float32),   # count of non-ignored examples
        ],
        compiler_params=pltpu.CompilerParams(
            dimension_semantics=("arbitrary",),   # axis carries the CE accumulation
            vmem_limit_bytes=32 * 1024 * 1024,    # v7x-safe scoped-VMEM budget
        ),
        cost_estimate=cost,
    )(pos, x_tok, w1b, b1r, wqa, bqa8)

    start_logits = logits2[0].reshape(B, S)
    end_logits = logits2[1].reshape(B, S)
    return start_logits, end_logits, loss


def reference(x, w1, b1, ws, we, bqa, sp, ep):
    """Plain-JAX f32 reference with identical semantics (valid in-range positions)."""
    h = jnp.tanh(jnp.einsum('bsh,hk->bsk', x, w1) + b1[None])    # [B, S, H]
    start_logits = jnp.sum(h * ws[None], axis=-1) + bqa[0]       # [B, S]
    end_logits = jnp.sum(h * we[None], axis=-1) + bqa[1]         # [B, S]

    def ce(logits, pos):
        lse = jax.scipy.special.logsumexp(logits, axis=-1)                # [B]
        picked = jnp.take_along_axis(logits, pos, axis=-1)[:, 0]          # [B]
        return jnp.mean(lse - picked)

    s_loss = ce(start_logits, sp)
    e_loss = ce(end_logits, ep)
    return start_logits, end_logits, jnp.sqrt(s_loss * e_loss)


if __name__ == "__main__":
    B, S, H = 2, 128, 32   # batch, sequence length (num classes for CE), hidden size

    key = jax.random.PRNGKey(0)
    kx, kw1, kb1, kws, kwe, kbq, ksp, kep = jax.random.split(key, 8)

    # Deterministic synthetic inputs & parameters (no checkpoint loading).
    x = jax.random.normal(kx, (B, S, H), dtype=jnp.float32)
    w1 = 0.05 * jax.random.normal(kw1, (H, H), dtype=jnp.float32)
    b1 = 0.05 * jax.random.normal(kb1, (1, H), dtype=jnp.float32)
    ws = 0.05 * jax.random.normal(kws, (1, H), dtype=jnp.float32)
    we = 0.05 * jax.random.normal(kwe, (1, H), dtype=jnp.float32)
    bqa = 0.05 * jax.random.normal(kbq, (2,), dtype=jnp.float32)
    start_positions = jax.random.randint(ksp, (B, 1), 0, S, dtype=jnp.int32)
    end_positions = jax.random.randint(kep, (B, 1), 0, S, dtype=jnp.int32)

    sl, el, loss = chaii_model_load_head(
        x, w1, b1, ws, we, bqa, start_positions, end_positions)
    jax.block_until_ready((sl, el, loss))

    sl_r, el_r, loss_r = reference(
        x, w1, b1, ws, we, bqa, start_positions, end_positions)

    # bf16 MXU operands vs. f32 reference -> slightly relaxed atol on the (small-magnitude) logits
    np.testing.assert_allclose(np.asarray(sl), np.asarray(sl_r), rtol=2e-2, atol=5e-3)
    np.testing.assert_allclose(np.asarray(el), np.asarray(el_r), rtol=2e-2, atol=5e-3)
    np.testing.assert_allclose(np.asarray(loss)[0, 0], np.asarray(loss_r), rtol=2e-2, atol=2e-3)

    print("KERNEL_OK")
</pallas_src>

<mosaic_0001>
module attributes {stable_mosaic.version = 11 : i64} {
  func.func @kernel(%arg0: i32, %arg1: memref<2x2xi32, #tpu.memory_space<smem>>, %arg2: memref<128x32xbf16, #tpu.memory_space<vmem>>, %arg3: memref<32x32xbf16, #tpu.memory_space<vmem>>, %arg4: memref<1x32xf32, #tpu.memory_space<vmem>>, %arg5: memref<8x32xbf16, #tpu.memory_space<vmem>>, %arg6: memref<8x1xf32, #tpu.memory_space<vmem>>, %arg7: memref<2x128xf32, #tpu.memory_space<vmem>>, %arg8: memref<1x1xf32, #tpu.memory_space<vmem>>, %arg9: memref<8x1xf32, #tpu.memory_space<vmem>>, %arg10: memref<8x1xf32, #tpu.memory_space<vmem>>) attributes {dimension_semantics = [#tpu.dimension_semantics<arbitrary>], iteration_bounds = array<i64: 2>, scalar_prefetch = 0 : i64, scratch_operands = 2 : i64, tpu.core_type = #tpu.core_type<tc>, window_params = [{transform_indices = @transform_0, window_bounds = array<i64: 2, 2>}, {transform_indices = @transform_1, window_bounds = array<i64: 128, 32>}, {pipeline_mode = #tpu.pipeline_mode<synchronous>, transform_indices = @transform_2, window_bounds = array<i64: 32, 32>}, {pipeline_mode = #tpu.pipeline_mode<synchronous>, transform_indices = @transform_3, window_bounds = array<i64: 1, 32>}, {pipeline_mode = #tpu.pipeline_mode<synchronous>, transform_indices = @transform_4, window_bounds = array<i64: 8, 32>}, {pipeline_mode = #tpu.pipeline_mode<synchronous>, transform_indices = @transform_5, window_bounds = array<i64: 8, 1>}, {transform_indices = @transform_6, window_bounds = array<i64: 2, 128>}, {pipeline_mode = #tpu.pipeline_mode<synchronous>, transform_indices = @transform_7, window_bounds = array<i64: 1, 1>}]} {
    %c0 = arith.constant 0 : index
    %c0_0 = arith.constant 0 : index
    %0 = vector.load %arg2[%c0, %c0_0] : memref<128x32xbf16, #tpu.memory_space<vmem>>, vector<128x32xbf16>
    %c0_1 = arith.constant 0 : index
    %c0_2 = arith.constant 0 : index
    %1 = vector.load %arg3[%c0_1, %c0_2] : memref<32x32xbf16, #tpu.memory_space<vmem>>, vector<32x32xbf16>
    %cst = arith.constant dense<0.000000e+00> : vector<128x32xf32>
    %2 = tpu.matmul %0, %1, %cst {dimension_numbers = #tpu.dot_dimension_numbers<[1], [0], [0], [1], [0, 0, 1, 1], [], []>} : vector<128x32xbf16>, vector<32x32xbf16>, vector<128x32xf32> -> vector<128x32xf32>
    %c0_3 = arith.constant 0 : index
    %c0_4 = arith.constant 0 : index
    %3 = vector.load %arg4[%c0_3, %c0_4] : memref<1x32xf32, #tpu.memory_space<vmem>>, vector<1x32xf32>
    %4 = vector.broadcast %3 : vector<1x32xf32> to vector<128x32xf32>
    %5 = arith.addf %2, %4 : vector<128x32xf32>
    %6 = math.tanh %5 : vector<128x32xf32>
    %c0_5 = arith.constant 0 : index
    %c0_6 = arith.constant 0 : index
    %7 = vector.load %arg5[%c0_5, %c0_6] : memref<8x32xbf16, #tpu.memory_space<vmem>>, vector<8x32xbf16>
    %8 = arith.truncf %6 : vector<128x32xf32> to vector<128x32xbf16>
    %cst_7 = arith.constant dense<0.000000e+00> : vector<8x128xf32>
    %9 = tpu.matmul %7, %8, %cst_7 {dimension_numbers = #tpu.dot_dimension_numbers<[1], [1], [0], [0], [0, 0, 1, 0], [], []>} : vector<8x32xbf16>, vector<128x32xbf16>, vector<8x128xf32> -> vector<8x128xf32>
    %c0_8 = arith.constant 0 : index
    %c0_9 = arith.constant 0 : index
    %10 = vector.load %arg6[%c0_8, %c0_9] : memref<8x1xf32, #tpu.memory_space<vmem>>, vector<8x1xf32>
    %11 = vector.broadcast %10 : vector<8x1xf32> to vector<8x128xf32>
    %12 = arith.addf %9, %11 : vector<8x128xf32>
    %13 = vector.extract_strided_slice %12 {offsets = [0, 0], sizes = [2, 128], strides = [1, 1]} : vector<8x128xf32> to vector<2x128xf32>
    %c0_10 = arith.constant 0 : index
    %c0_11 = arith.constant 0 : index
    %14 = vector.load %arg7[%c0_10, %c0_11] : memref<2x128xf32, #tpu.memory_space<vmem>>, vector<2x128xf32>
    tpu.vector_store %arg7[%c0_10, %c0_11], %13 {strides = array<i32>} : memref<2x128xf32, #tpu.memory_space<vmem>>, vector<2x128xf32>,
    %15 = arith.index_cast %arg0 : i32 to index
    %c0_12 = arith.constant 0 : index
    %16 = memref.load %arg1[%15, %c0_12] : memref<2x2xi32, #tpu.memory_space<smem>>
    %17 = arith.index_cast %arg0 : i32 to index
    %c1 = arith.constant 1 : index
    %18 = memref.load %arg1[%17, %c1] : memref<2x2xi32, #tpu.memory_space<smem>>
    %19 = tpu.iota {dimensions = array<i32: 0>} : vector<8x1xi32>
    %c0_i32 = arith.constant 0 : i32
    %20 = vector.broadcast %c0_i32 : i32 to vector<8x1xi32>
    %21 = arith.cmpi eq, %19, %20 : vector<8x1xi32>
    %c1_i32 = arith.constant 1 : i32
    %22 = vector.broadcast %c1_i32 : i32 to vector<8x1xi32>
    %23 = arith.cmpi eq, %19, %22 : vector<8x1xi32>
    %c-100_i32 = arith.constant -100 : i32
    %24 = vector.broadcast %18 : i32 to vector<8x1xi32>
    %25 = vector.broadcast %c-100_i32 : i32 to vector<8x1xi32>
    %26 = arith.select %23, %24, %25 : vector<8x1xi1>, vector<8x1xi32>
    %27 = vector.broadcast %16 : i32 to vector<8x1xi32>
    %28 = arith.select %21, %27, %26 : vector<8x1xi1>, vector<8x1xi32>
    %29 = tpu.iota {dimensions = array<i32: 1>} : vector<8x128xi32>
    %cst_13 = arith.constant dense<0xFF800000> : vector<8xf32>
    %30 = vector.multi_reduction <maximumf>, %12, %cst_13 [1] : vector<8x128xf32> to vector<8xf32>
    %31 = vector.shape_cast %30 : vector<8xf32> to vector<8x1xf32>
    %32 = vector.broadcast %31 : vector<8x1xf32> to vector<8x128xf32>
    %33 = arith.subf %12, %32 : vector<8x128xf32>
    %34 = math.exp %33 : vector<8x128xf32>
    %cst_14 = arith.constant dense<0.000000e+00> : vector<8xf32>
    %35 = vector.multi_reduction <add>, %34, %cst_14 [1] : vector<8x128xf32> to vector<8xf32>
    %36 = vector.shape_cast %35 : vector<8xf32> to vector<8x1xf32>
    %37 = math.log %36 : vector<8x1xf32>
    %38 = arith.addf %31, %37 : vector<8x1xf32>
    %39 = vector.broadcast %28 : vector<8x1xi32> to vector<8x128xi32>
    %40 = arith.cmpi eq, %29, %39 : vector<8x128xi32>
    %cst_15 = arith.constant 0.000000e+00 : f32
    %41 = vector.broadcast %cst_15 : f32 to vector<8x128xf32>
    %42 = arith.select %40, %12, %41 : vector<8x128xi1>, vector<8x128xf32>
    %cst_16 = arith.constant dense<0.000000e+00> : vector<8xf32>
    %43 = vector.multi_reduction <add>, %42, %cst_16 [1] : vector<8x128xf32> to vector<8xf32>
    %44 = vector.shape_cast %43 : vector<8xf32> to vector<8x1xf32>
    %c0_i32_17 = arith.constant 0 : i32
    %45 = vector.broadcast %c0_i32_17 : i32 to vector<8x1xi32>
    %46 = arith.cmpi sge, %28, %45 : vector<8x1xi32>
    %c128_i32 = arith.constant 128 : i32
    %47 = vector.broadcast %c128_i32 : i32 to vector<8x1xi32>
    %48 = arith.cmpi slt, %28, %47 : vector<8x1xi32>
    %49 = arith.andi %46, %48 : vector<8x1xi1>
    %50 = arith.extui %49 : vector<8x1xi1> to vector<8x1xi32>
    %51 = arith.sitofp %50 : vector<8x1xi32> to vector<8x1xf32>
    %c0_i32_18 = arith.constant 0 : i32
    %52 = arith.cmpi eq, %arg0, %c0_i32_18 : i32
    %53 = arith.extui %52 : i1 to i32
    %c0_i32_19 = arith.constant 0 : i32
    %54 = arith.cmpi ne, %53, %c0_i32_19 : i32
    scf.if %54 {
      %cst_30 = arith.constant 0.000000e+00 : f32
      %66 = vector.broadcast %cst_30 : f32 to vector<8x1xf32>
      %c0_31 = arith.constant 0 : index
      %c0_32 = arith.constant 0 : index
      %67 = vector.load %arg9[%c0_31, %c0_32] : memref<8x1xf32, #tpu.memory_space<vmem>>, vector<8x1xf32>
      tpu.vector_store %arg9[%c0_31, %c0_32], %66 {strides = array<i32>} : memref<8x1xf32, #tpu.memory_space<vmem>>, vector<8x1xf32>,
      %cst_33 = arith.constant 0.000000e+00 : f32
      %68 = vector.broadcast %cst_33 : f32 to vector<8x1xf32>
      %c0_34 = arith.constant 0 : index
      %c0_35 = arith.constant 0 : index
      %69 = vector.load %arg10[%c0_34, %c0_35] : memref<8x1xf32, #tpu.memory_space<vmem>>, vector<8x1xf32>
      tpu.vector_store %arg10[%c0_34, %c0_35], %68 {strides = array<i32>} : memref<8x1xf32, #tpu.memory_space<vmem>>, vector<8x1xf32>,
    } else {
    }
    %c0_20 = arith.constant 0 : index
    %c0_21 = arith.constant 0 : index
    %55 = vector.load %arg9[%c0_20, %c0_21] : memref<8x1xf32, #tpu.memory_space<vmem>>, vector<8x1xf32>
    %56 = arith.subf %38, %44 : vector<8x1xf32>
    %57 = arith.mulf %51, %56 : vector<8x1xf32>
    %58 = arith.addf %55, %57 : vector<8x1xf32>
    %c0_22 = arith.constant 0 : index
    %c0_23 = arith.constant 0 : index
    %59 = vector.load %arg9[%c0_22, %c0_23] : memref<8x1xf32, #tpu.memory_space<vmem>>, vector<8x1xf32>
    tpu.vector_store %arg9[%c0_22, %c0_23], %58 {strides = array<i32>} : memref<8x1xf32, #tpu.memory_space<vmem>>, vector<8x1xf32>,
    %c0_24 = arith.constant 0 : index
    %c0_25 = arith.constant 0 : index
    %60 = vector.load %arg10[%c0_24, %c0_25] : memref<8x1xf32, #tpu.memory_space<vmem>>, vector<8x1xf32>
    %61 = arith.addf %60, %51 : vector<8x1xf32>
    %c0_26 = arith.constant 0 : index
    %c0_27 = arith.constant 0 : index
    %62 = vector.load %arg10[%c0_26, %c0_27] : memref<8x1xf32, #tpu.memory_space<vmem>>, vector<8x1xf32>
    tpu.vector_store %arg10[%c0_26, %c0_27], %61 {strides = array<i32>} : memref<8x1xf32, #tpu.memory_space<vmem>>, vector<8x1xf32>,
    %c1_i32_28 = arith.constant 1 : i32
    %63 = arith.cmpi eq, %arg0, %c1_i32_28 : i32
    %64 = arith.extui %63 : i1 to i32
    %c0_i32_29 = arith.constant 0 : i32
    %65 = arith.cmpi ne, %64, %c0_i32_29 : i32
    scf.if %65 {
      %c0_30 = arith.constant 0 : index
      %c0_31 = arith.constant 0 : index
      %66 = vector.load %arg9[%c0_30, %c0_31] : memref<8x1xf32, #tpu.memory_space<vmem>>, vector<8x1xf32>
      %c0_32 = arith.constant 0 : index
      %c0_33 = arith.constant 0 : index
      %67 = vector.load %arg10[%c0_32, %c0_33] : memref<8x1xf32, #tpu.memory_space<vmem>>, vector<8x1xf32>
      %68 = arith.divf %66, %67 : vector<8x1xf32>
      %69 = vector.extract_strided_slice %68 {offsets = [0, 0], sizes = [1, 1], strides = [1, 1]} : vector<8x1xf32> to vector<1x1xf32>
      %70 = vector.extract_strided_slice %68 {offsets = [1, 0], sizes = [1, 1], strides = [1, 1]} : vector<8x1xf32> to vector<1x1xf32>
      %71 = arith.mulf %69, %70 : vector<1x1xf32>
      %72 = math.sqrt %71 : vector<1x1xf32>
      %c0_34 = arith.constant 0 : index
      %c0_35 = arith.constant 0 : index
      %73 = vector.load %arg8[%c0_34, %c0_35] : memref<1x1xf32, #tpu.memory_space<vmem>>, vector<1x1xf32>
      tpu.vector_store %arg8[%c0_34, %c0_35], %72 {strides = array<i32>} : memref<1x1xf32, #tpu.memory_space<vmem>>, vector<1x1xf32>,
    } else {
    }
    return
  }
  func.func @transform_0(%arg0: i32) -> (i32, i32) {
    %c0_i32 = arith.constant 0 : i32
    %c0_i32_0 = arith.constant 0 : i32
    %c0_i32_1 = arith.constant 0 : i32
    return %c0_i32, %c0_i32_0 : i32, i32
  }
  func.func @transform_1(%arg0: i32) -> (i32, i32) {
    %c0_i32 = arith.constant 0 : i32
    %c0_i32_0 = arith.constant 0 : i32
    return %arg0, %c0_i32 : i32, i32
  }
  func.func @transform_2(%arg0: i32) -> (i32, i32) {
    %c0_i32 = arith.constant 0 : i32
    %c0_i32_0 = arith.constant 0 : i32
    %c0_i32_1 = arith.constant 0 : i32
    return %c0_i32, %c0_i32_0 : i32, i32
  }
  func.func @transform_3(%arg0: i32) -> (i32, i32) {
    %c0_i32 = arith.constant 0 : i32
    %c0_i32_0 = arith.constant 0 : i32
    %c0_i32_1 = arith.constant 0 : i32
    return %c0_i32, %c0_i32_0 : i32, i32
  }
  func.func @transform_4(%arg0: i32) -> (i32, i32) {
    %c0_i32 = arith.constant 0 : i32
    %c0_i32_0 = arith.constant 0 : i32
    %c0_i32_1 = arith.constant 0 : i32
    return %c0_i32, %c0_i32_0 : i32, i32
  }
  func.func @transform_5(%arg0: i32) -> (i32, i32) {
    %c0_i32 = arith.constant 0 : i32
    %c0_i32_0 = arith.constant 0 : i32
    %c0_i32_1 = arith.constant 0 : i32
    return %c0_i32, %c0_i32_0 : i32, i32
  }
  func.func @transform_6(%arg0: i32) -> (i32, i32) {
    %c0_i32 = arith.constant 0 : i32
    %c0_i32_0 = arith.constant 0 : i32
    return %c0_i32, %arg0 : i32, i32
  }
  func.func @transform_7(%arg0: i32) -> (i32, i32) {
    %c0_i32 = arith.constant 0 : i32
    %c0_i32_0 = arith.constant 0 : i32
    %c0_i32_1 = arith.constant 0 : i32
    return %c0_i32, %c0_i32_0 : i32, i32
  }
}

</mosaic_0001>

<llo_original>
// kernel: tpu_custom_call.1
$region0: #{tpu_custom_call.1}
  #allocation0 [shape = 'u32[]', space=smem, size = 0x4, offset = 0x4, fixed_abs, tag = 'smem constant byte address 0x4 - core index']
  #allocation1 [shape = 'u32[72,128]{1,0:T(1,128)}', space=vmem, size = 0x9000, scoped, tag = 'internal scratch']
  #allocation2 [shape = 'f32[8,1]{1,0:T(8,128)}', space=vmem, size = 0x1000, scoped, tag = 'scratch operand']
  #allocation3 [shape = 'f32[8,1]{1,0:T(8,128)}', space=vmem, size = 0x1000, scoped, tag = 'scratch operand']
  %s0 = inlined_call_operand.vmem [shape: s32[2,2], index: 0, kind: input, shape index: {}]
  %s1 = inlined_call_operand.vmem [shape: bf16[256,32], index: 1, kind: input, shape index: {}]
  %s2 = inlined_call_operand.vmem [shape: bf16[32,32], index: 2, kind: input, shape index: {}]
  %s3 = inlined_call_operand.vmem [shape: f32[1,32], index: 3, kind: input, shape index: {}]
  %s4 = inlined_call_operand.vmem [shape: bf16[8,32], index: 4, kind: input, shape index: {}]
  %s5 = inlined_call_operand.vmem [shape: f32[8,1], index: 5, kind: input, shape index: {}]
  %s6 = inlined_call_operand.hbm [shape: f32[2,256], index: 6, kind: output, shape index: {0}]
  %s7 = inlined_call_operand.hbm [shape: f32[1,1], index: 7, kind: output, shape index: {1}]
  %8 = xla_tuple %s6, %s7
  %s9 = sld [smem:[#allocation0]]
  $region77: #{tpu_custom_call.1} parent=0
    _
  %s11 = ssub.s32 1, %s9
  %s12 = scalar_select 0, %s11, %s9
  $region1: #{tpu_custom_call.1} parent=0
    #allocation4 [shape = 'u8[1024]{0}', space=smem, size = 0x400, scoped, tag = 'input window, operand 0, single buffered']
    #allocation5 [shape = 's32[2]{0}', space=sflag, size = 0x8, scoped, tag = 'scoped memory for tpu_custom_call.1']
    #allocation6 [shape = 's32[2]{0}', space=sflag, size = 0x8, scoped, tag = 'scoped memory for tpu_custom_call.1']
    #allocation7 [shape = 'u8[2048]{0}', space=vmem, size = 0x800, scoped, tag = 'output window, operand 0']
    #allocation8 [shape = 'u8[512]{0}', space=vmem, size = 0x400, scoped, tag = 'output window, operand 1, single buffered']
    #allocation9 [shape = 's32[1]{0}', space=sflag, size = 0x4, scoped, tag = 'scoped memory for tpu_custom_call.1']
    %13 = vsyncpa [#allocation6], 0
    %14 = vsyncpa [#allocation5], 0
    %s15 = scalar_lea.sflag [#allocation5], 1
    %16 = vsyncpa %s15, 0
    %17 = vsyncpa [#allocation9], 0
    loop: start=0, step=1, limit=4
    $region2: #{tpu_custom_call.1} parent=1 // loop_pre_header
      _
    $region3: #{tpu_custom_call.1} parent=1 // loop_header
      %s19 = sphi 0, %s23
      %p20 = scmp.ge.s32.totalorder %s19, 4
      %s27 = sphi 0, %s27
      %s29 = sphi 0, %s27
      %s30 = sphi 0, %s29
      %s44 = sphi 0, %s30
      %s50 = sphi 0, %s52
      %s53 = sphi 0, %s50
      %s54 = sphi 0, %s53
      %s70 = sphi 0, %s54
      %s74 = sphi 0, %s74
      %s76 = sphi 0, %s74
      %s77 = sphi 0, %s76
      %s91 = sphi 0, %s77
      %s95 = sphi 0, %s95
      %s97 = sphi 0, %s95
      %s98 = sphi 0, %s97
      %s112 = sphi 0, %s98
      %s116 = sphi 0, %s116
      %s118 = sphi 0, %s116
      %s119 = sphi 0, %s118
      %s133 = sphi 0, %s119
      %s137 = sphi 0, %s137
      %s139 = sphi 0, %s137
      %s140 = sphi 0, %s139
      %s154 = sphi 0, %s140
      %s160 = sphi 0, %s162
      %s163 = sphi 0, %s160
      %s164 = sphi 0, %s163
      %s180 = sphi 0, %s164
      %s184 = sphi 0, %s184
      %s186 = sphi 0, %s184
      %s187 = sphi 0, %s186
      %s201 = sphi 0, %s187
    $region4: #{tpu_custom_call.1} parent=1 // loop_header_branch
      %22 = sbr.rel (%p20) target = $region8
    $region5: #{tpu_custom_call.1} parent=1 // loop_body
      %s24 = ssub.s32 %s19, 1
      %s25 = ssub.s32 %s19, 2
      %s26 = sadd.s32 %s19, 1
      %s28 = sadd.s32 %s27, 1
      %p31 = scmp.eq.s32.totalorder %s19, 1
      %p32 = scmp.ne.s32.totalorder %s27, %s29
      %p33 = scmp.eq.s32.totalorder %s19, 0
      %p34 = por %p32, %p33
      %p35 = scmp.ne.s32.totalorder %s27, %s29
      %p36 = scmp.eq.s32.totalorder %s24, 1
      %p37 = por %p35, %p36
      %p38 = scmp.ne.s32.totalorder %s29, %s30
      %p39 = scmp.eq.s32.totalorder %s24, 0
      %p40 = por %p38, %p39
      %p41 = scmp.ne.s32.totalorder %s29, %s30
      %p42 = scmp.eq.s32.totalorder %s25, 1
      %p43 = por %p41, %p42
      %p45 = scmp.ne.s32.totalorder %s30, %s44
      %p46 = scmp.eq.s32.totalorder %s25, 0
      %p47 = por %p45, %p46
      %s48 = ssub.s32 %s19, %s26
      %p49 = scmp.eq.s32.totalorder %s48, 0
      %s51 = sadd.s32 %s50, 1
      %s52 = scalar_select %p49, %s50, %s51
      %p55 = pneg %p49
      %p56 = scmp.eq.s32.totalorder %s19, 1
      %p57 = por %p55, %p56
      %p58 = scmp.ne.s32.totalorder %s50, %s53
      %p59 = scmp.eq.s32.totalorder %s19, 0
      %p60 = por %p58, %p59
      %p61 = scmp.ne.s32.totalorder %s50, %s53
      %p62 = scmp.eq.s32.totalorder %s24, 1
      %p63 = por %p61, %p62
      %p64 = scmp.ne.s32.totalorder %s53, %s54
      %p65 = scmp.eq.s32.totalorder %s24, 0
      %p66 = por %p64, %p65
      %p67 = scmp.ne.s32.totalorder %s53, %s54
      %p68 = scmp.eq.s32.totalorder %s25, 1
      %p69 = por %p67, %p68
      %p71 = scmp.ne.s32.totalorder %s54, %s70
      %p72 = scmp.eq.s32.totalorder %s25, 0
      %p73 = por %p71, %p72
      %s75 = sadd.s32 %s74, 1
      %p78 = scmp.eq.s32.totalorder %s19, 1
      %p79 = scmp.ne.s32.totalorder %s74, %s76
      %p80 = scmp.eq.s32.totalorder %s19, 0
      %p81 = por %p79, %p80
      %p82 = scmp.ne.s32.totalorder %s74, %s76
      %p83 = scmp.eq.s32.totalorder %s24, 1
      %p84 = por %p82, %p83
      %p85 = scmp.ne.s32.totalorder %s76, %s77
      %p86 = scmp.eq.s32.totalorder %s24, 0
      %p87 = por %p85, %p86
      %p88 = scmp.ne.s32.totalorder %s76, %s77
      %p89 = scmp.eq.s32.totalorder %s25, 1
      %p90 = por %p88, %p89
      %p92 = scmp.ne.s32.totalorder %s77, %s91
      %p93 = scmp.eq.s32.totalorder %s25, 0
      %p94 = por %p92, %p93
      %s96 = sadd.s32 %s95, 1
      %p99 = scmp.eq.s32.totalorder %s19, 1
      %p100 = scmp.ne.s32.totalorder %s95, %s97
      %p101 = scmp.eq.s32.totalorder %s19, 0
      %p102 = por %p100, %p101
      %p103 = scmp.ne.s32.totalorder %s95, %s97
      %p104 = scmp.eq.s32.totalorder %s24, 1
      %p105 = por %p103, %p104
      %p106 = scmp.ne.s32.totalorder %s97, %s98
      %p107 = scmp.eq.s32.totalorder %s24, 0
      %p108 = por %p106, %p107
      %p109 = scmp.ne.s32.totalorder %s97, %s98
      %p110 = scmp.eq.s32.totalorder %s25, 1
      %p111 = por %p109, %p110
      %p113 = scmp.ne.s32.totalorder %s98, %s112
      %p114 = scmp.eq.s32.totalorder %s25, 0
      %p115 = por %p113, %p114
      %s117 = sadd.s32 %s116, 1
      %p120 = scmp.eq.s32.totalorder %s19, 1
      %p121 = scmp.ne.s32.totalorder %s116, %s118
      %p122 = scmp.eq.s32.totalorder %s19, 0
      %p123 = por %p121, %p122
      %p124 = scmp.ne.s32.totalorder %s116, %s118
      %p125 = scmp.eq.s32.totalorder %s24, 1
      %p126 = por %p124, %p125
      %p127 = scmp.ne.s32.totalorder %s118, %s119
      %p128 = scmp.eq.s32.totalorder %s24, 0
      %p129 = por %p127, %p128
      %p130 = scmp.ne.s32.totalorder %s118, %s119
      %p131 = scmp.eq.s32.totalorder %s25, 1
      %p132 = por %p130, %p131
      %p134 = scmp.ne.s32.totalorder %s119, %s133
      %p135 = scmp.eq.s32.totalorder %s25, 0
      %p136 = por %p134, %p135
      %s138 = sadd.s32 %s137, 1
      %p141 = scmp.eq.s32.totalorder %s19, 1
      %p142 = scmp.ne.s32.totalorder %s137, %s139
      %p143 = scmp.eq.s32.totalorder %s19, 0
      %p144 = por %p142, %p143
      %p145 = scmp.ne.s32.totalorder %s137, %s139
      %p146 = scmp.eq.s32.totalorder %s24, 1
      %p147 = por %p145, %p146
      %p148 = scmp.ne.s32.totalorder %s139, %s140
      %p149 = scmp.eq.s32.totalorder %s24, 0
      %p150 = por %p148, %p149
      %p151 = scmp.ne.s32.totalorder %s139, %s140
      %p152 = scmp.eq.s32.totalorder %s25, 1
      %p153 = por %p151, %p152
      %p155 = scmp.ne.s32.totalorder %s140, %s154
      %p156 = scmp.eq.s32.totalorder %s25, 0
      %p157 = por %p155, %p156
      %s158 = ssub.s32 %s19, %s26
      %p159 = scmp.eq.s32.totalorder %s158, 0
      %s161 = sadd.s32 %s160, 1
      %s162 = scalar_select %p159, %s160, %s161
      %p165 = pneg %p159
      %p166 = scmp.eq.s32.totalorder %s19, 1
      %p167 = por %p165, %p166
      %p168 = scmp.ne.s32.totalorder %s160, %s163
      %p169 = scmp.eq.s32.totalorder %s19, 0
      %p170 = por %p168, %p169
      %p171 = scmp.ne.s32.totalorder %s160, %s163
      %p172 = scmp.eq.s32.totalorder %s24, 1
      %p173 = por %p171, %p172
      %p174 = scmp.ne.s32.totalorder %s163, %s164
      %p175 = scmp.eq.s32.totalorder %s24, 0
      %p176 = por %p174, %p175
      %p177 = scmp.ne.s32.totalorder %s163, %s164
      %p178 = scmp.eq.s32.totalorder %s25, 1
      %p179 = por %p177, %p178
      %p181 = scmp.ne.s32.totalorder %s164, %s180
      %p182 = scmp.eq.s32.totalorder %s25, 0
      %p183 = por %p181, %p182
      %s185 = sadd.s32 %s184, 1
      %p188 = scmp.eq.s32.totalorder %s19, 1
      %p189 = scmp.ne.s32.totalorder %s184, %s186
      %p190 = scmp.eq.s32.totalorder %s19, 0
      %p191 = por %p189, %p190
      %p192 = scmp.ne.s32.totalorder %s184, %s186
      %p193 = scmp.eq.s32.totalorder %s24, 1
      %p194 = por %p192, %p193
      %p195 = scmp.ne.s32.totalorder %s186, %s187
      %p196 = scmp.eq.s32.totalorder %s24, 0
      %p197 = por %p195, %p196
      %p198 = scmp.ne.s32.totalorder %s186, %s187
      %p199 = scmp.eq.s32.totalorder %s25, 1
      %p200 = por %p198, %p199
      %p202 = scmp.ne.s32.totalorder %s187, %s201
      %p203 = scmp.eq.s32.totalorder %s25, 0
      %p204 = por %p202, %p203
      %p205 = scmp.le.s32.totalorder 1, %s19
      %p206 = scmp.lt.s32.totalorder %s19, 3
      %p207 = pnand %p205, %p206
      %p208 = pneg %p207
      // Predicated region
      $region9: #{tpu_custom_call.1} parent=5 // pred_check
        _
      $region10: #{tpu_custom_call.1} parent=5 // pred_check_branch
        %210 = sbr.rel (%p207) target = $region12
      $region11: #{tpu_custom_call.1} parent=5 // pred_region
        %s211 = ssub.s32 %s19, 1
        // Predicated region
        $region13: #{tpu_custom_call.1} parent=11 // pred_check
          %p212 = pneg %p40
        $region14: #{tpu_custom_call.1} parent=11 // pred_check_branch
          %214 = sbr.rel (%p212) target = $region16
        $region15: #{tpu_custom_call.1} parent=11 // pred_region
          %216 = vsyncadd [#allocation6], 0
          %s218 = sshll.u32 %s0, 4
          %s219 = int_to_ptr.vmem [resolvable:$true] %s218
          %221 = dma.vmem_to_smem %s219, 32, [#allocation4], [#allocation6]
        $region16: #{tpu_custom_call.1} parent=11 // pred_fallthru
          _
        // Predicated region
        $region17: #{tpu_custom_call.1} parent=11 // pred_check
          %p222 = pneg %p87
        $region18: #{tpu_custom_call.1} parent=11 // pred_check_branch
          %224 = sbr.rel (%p222) target = $region20
        $region19: #{tpu_custom_call.1} parent=11 // pred_region
          _
        $region20: #{tpu_custom_call.1} parent=11 // pred_fallthru
          _
        // Predicated region
        $region21: #{tpu_custom_call.1} parent=11 // pred_check
          %p225 = pneg %p108
        $region22: #{tpu_custom_call.1} parent=11 // pred_check_branch
          %227 = sbr.rel (%p225) target = $region24
        $region23: #{tpu_custom_call.1} parent=11 // pred_region
          _
        $region24: #{tpu_custom_call.1} parent=11 // pred_fallthru
          _
        // Predicated region
        $region25: #{tpu_custom_call.1} parent=11 // pred_check
          %p228 = pneg %p129
        $region26: #{tpu_custom_call.1} parent=11 // pred_check_branch
          %230 = sbr.rel (%p228) target = $region28
        $region27: #{tpu_custom_call.1} parent=11 // pred_region
          _
        $region28: #{tpu_custom_call.1} parent=11 // pred_fallthru
          _
        // Predicated region
        $region29: #{tpu_custom_call.1} parent=11 // pred_check
          %p231 = pneg %p150
        $region30: #{tpu_custom_call.1} parent=11 // pred_check_branch
          %233 = sbr.rel (%p231) target = $region32
        $region31: #{tpu_custom_call.1} parent=11 // pred_region
          _
        $region32: #{tpu_custom_call.1} parent=11 // pred_fallthru
          _
      $region12: #{tpu_custom_call.1} parent=5 // pred_fallthru
        _
      %p234 = scmp.lt.s32.totalorder %s19, 2
      // Predicated region
      $region33: #{tpu_custom_call.1} parent=5 // pred_check
        %p235 = pneg %p234
      $region34: #{tpu_custom_call.1} parent=5 // pred_check_branch
        %237 = sbr.rel (%p235) target = $region36
      $region35: #{tpu_custom_call.1} parent=5 // pred_region
        // Predicated region
        $region37: #{tpu_custom_call.1} parent=35 // pred_check
          %p238 = pneg %p60
        $region38: #{tpu_custom_call.1} parent=35 // pred_check_branch
          %240 = sbr.rel (%p238) target = $region40
        $region39: #{tpu_custom_call.1} parent=35 // pred_region
          %s241 = smul.u32 16, %s19
          %p242 = scmp.lt.s32.totalorder %s241, 31
          %s243 = scalar_select %p242, %s241, 31
          %s244 = smul.addr %s243, 4
          %s245 = scalar_lea.vmem %s1, %s244
          %s246 = smul.u32 16, %s19
        $region40: #{tpu_custom_call.1} parent=35 // pred_fallthru
          _
      $region36: #{tpu_custom_call.1} parent=5 // pred_fallthru
        _
      %p247 = scmp.le.s32.totalorder 1, %s19
      %p248 = scmp.lt.s32.totalorder %s19, 3
      %p249 = pnand %p247, %p248
      %p250 = pneg %p249
      // Predicated region
      $region41: #{tpu_custom_call.1} parent=5 // pred_check
        _
      $region42: #{tpu_custom_call.1} parent=5 // pred_check_branch
        %252 = sbr.rel (%p249) target = $region44
      $region43: #{tpu_custom_call.1} parent=5 // pred_region
        %s253 = ssub.s32 %s19, 1
        // Predicated region
        $region45: #{tpu_custom_call.1} parent=43 // pred_check
          %p254 = pneg %p40
        $region46: #{tpu_custom_call.1} parent=43 // pred_check_branch
          %256 = sbr.rel (%p254) target = $region48
        $region47: #{tpu_custom_call.1} parent=43 // pred_region
          %258 = dma.done [#allocation6], 32
        $region48: #{tpu_custom_call.1} parent=43 // pred_fallthru
          _
        %259 = sfence
        %p260 = pneg %p40
        %p261 = pneg %p37
        %s262 = smul.u32 16, %s24
        %p263 = scmp.lt.s32.totalorder %s262, 31
        %s264 = scalar_select %p263, %s262, 31
        %s265 = smul.addr %s264, 4
        %s266 = scalar_lea.vmem %s1, %s265
        %p267 = pneg %p66
        %p268 = pneg %p63
        %p269 = pneg %p87
        %p270 = pneg %p84
        %p271 = pneg %p108
        %p272 = pneg %p105
        %p273 = pneg %p129
        %p274 = pneg %p126
        %p275 = pneg %p150
        %p276 = pneg %p147
        %p277 = pneg %p176
        %p278 = pneg %p173
        %s279 = sand.u32 %s163, 1
        %s280 = scalar_lea.sflag [#allocation5], %s279
        %s281 = sand.u32 %s163, 1
        %s282 = smul.addr %s281, 2
        %s283 = scalar_lea.vmem [#allocation7], %s282
        %p284 = pneg %p197
        %p285 = pneg %p194
        %s286 = smul.u32 16, %s24
        %p287 = scmp.lt.s32.totalorder %s286, 31
        %s288 = scalar_select %p287, %s286, 31
        %s289 = smul.addr %s288, 4
        %s290 = scalar_lea.vmem %s1, %s289
        %s291 = smul.u32 16, %s24
        %v293 = vld [vmem:[%s290] sm:$0xf]
        %v294 = vld [vmem:[%s290 + $0x4] sm:$0xf]
        %v295 = vld [vmem:[%s290 + $0x8] sm:$0xf]
        %v296 = vld [vmem:[%s290 + $0xc] sm:$0xf]
        %v297 = vld [vmem:[%s290 + $0x10] sm:$0xf]
        %v298 = vld [vmem:[%s290 + $0x14] sm:$0xf]
        %v299 = vld [vmem:[%s290 + $0x18] sm:$0xf]
        %v300 = vld [vmem:[%s290 + $0x1c] sm:$0xf]
        %v301 = vld [vmem:[%s290 + $0x20] sm:$0xf]
        %v302 = vld [vmem:[%s290 + $0x24] sm:$0xf]
        %v303 = vld [vmem:[%s290 + $0x28] sm:$0xf]
        %v304 = vld [vmem:[%s290 + $0x2c] sm:$0xf]
        %v305 = vld [vmem:[%s290 + $0x30] sm:$0xf]
        %v306 = vld [vmem:[%s290 + $0x34] sm:$0xf]
        %v307 = vld [vmem:[%s290 + $0x38] sm:$0xf]
        %v308 = vld [vmem:[%s290 + $0x3c] sm:$0xf]
        %v309 = vld [vmem:[%s2] sm:$0xf]
        %v310 = vld [vmem:[%s2 + $0x4] sm:$0xf]
        %v311 = vld [vmem:[%s2 + $0x8] sm:$0xf]
        %v312 = vld [vmem:[%s2 + $0xc] sm:$0xf]
        %v313 = vld [vmem:[%s3] sm:$0x1]
        %v315 = vperm.slane %v313, 0
        %v333 = vunpack.c.l.b16 %v293
        %v334 = vunpack.c.l.b16 %v294
        %v335 = vunpack.c.l.b16 %v295
        %v336 = vunpack.c.l.b16 %v296
        %v337 = vunpack.c.l.b16 %v297
        %v338 = vunpack.c.l.b16 %v298
        %v339 = vunpack.c.l.b16 %v299
        %v340 = vunpack.c.l.b16 %v300
        %v341 = vunpack.c.l.b16 %v301
        %v342 = vunpack.c.l.b16 %v302
        %v343 = vunpack.c.l.b16 %v303
        %v344 = vunpack.c.l.b16 %v304
        %v345 = vunpack.c.l.b16 %v305
        %v346 = vunpack.c.l.b16 %v306
        %v347 = vunpack.c.l.b16 %v307
        %v348 = vunpack.c.l.b16 %v308
        %v349 = vpack.c.b16 %v334, %v333
        %v350 = vpack.c.b16 %v336, %v335
        %v351 = vpack.c.b16 %v338, %v337
        %v352 = vpack.c.b16 %v340, %v339
        %v353 = vpack.c.b16 %v342, %v341
        %v354 = vpack.c.b16 %v344, %v343
        %v355 = vpack.c.b16 %v346, %v345
        %v356 = vpack.c.b16 %v348, %v347
        %v361 = vunpack.c.l.b16 %v309
        %v362 = vunpack.c.l.b16 %v310
        %v363 = vunpack.c.l.b16 %v311
        %v364 = vunpack.c.l.b16 %v312
        %v365 = vpack.c.b16 %v362, %v361
        %v366 = vpack.c.b16 %v364, %v363
        %vm369 = vcmask 261120
        %v371 = vsel %vm369, %v349, 0
        %v374 = vsel %vm369, %v350, 0
        %v377 = vsel %vm369, %v351, 0
        %v380 = vsel %vm369, %v352, 0
        %v383 = vsel %vm369, %v353, 0
        %v386 = vsel %vm369, %v354, 0
        %v389 = vsel %vm369, %v355, 0
        %v392 = vsel %vm369, %v356, 0
        %394 = vmatpush.bf16.msra.mxu0 0
        %395 = vmatpush.bf16.msra.mxu0 0
        %396 = vmatpush.bf16.msra.mxu0 0
        %397 = vmatpush.bf16.msra.mxu0 0
        %398 = vmatpush.bf16.msra.mxu0 0
        %399 = vmatpush.bf16.msra.mxu0 0
        %400 = vmatpush.bf16.msra.mxu0 %v366
        %401 = vmatpush.bf16.msra.mxu0 %v365
        %402 = vmatmul.bf16.gmra.mxu0 %v371
        %v403 = vpop.f32.mrf.mxu0
        %v404 = vadd.f32 %v315, %v403
        %v405 = vpop.f32.mrf.mxu0
        %v406 = vadd.f32 %v315, %v405
        %407 = vmatmul.bf16.gmra.mxu0 %v374
        %v408 = vpop.f32.mrf.mxu0
        %v409 = vadd.f32 %v315, %v408
        %v410 = vpop.f32.mrf.mxu0
        %v411 = vadd.f32 %v315, %v410
        %412 = vmatmul.bf16.gmra.mxu0 %v377
        %v413 = vpop.f32.mrf.mxu0
        %v414 = vadd.f32 %v315, %v413
        %v415 = vpop.f32.mrf.mxu0
        %v416 = vadd.f32 %v315, %v415
        %417 = vmatmul.bf16.gmra.mxu0 %v380
        %v418 = vpop.f32.mrf.mxu0
        %v419 = vadd.f32 %v315, %v418
        %v420 = vpop.f32.mrf.mxu0
        %v421 = vadd.f32 %v315, %v420
        %422 = vmatmul.bf16.gmra.mxu0 %v383
        %v423 = vpop.f32.mrf.mxu0
        %v424 = vadd.f32 %v315, %v423
        %v425 = vpop.f32.mrf.mxu0
        %v426 = vadd.f32 %v315, %v425
        %427 = vmatmul.bf16.gmra.mxu0 %v386
        %v428 = vpop.f32.mrf.mxu0
        %v429 = vadd.f32 %v315, %v428
        %v430 = vpop.f32.mrf.mxu0
        %v431 = vadd.f32 %v315, %v430
        %432 = vmatmul.bf16.gmra.mxu0 %v389
        %v433 = vpop.f32.mrf.mxu0
        %v434 = vadd.f32 %v315, %v433
        %v435 = vpop.f32.mrf.mxu0
        %v436 = vadd.f32 %v315, %v435
        %437 = vmatmul.bf16.gmra.mxu0 %v392
        %v438 = vpop.f32.mrf.mxu0
        %v439 = vadd.f32 %v315, %v438
        %v440 = vpop.f32.mrf.mxu0
        %v441 = vadd.f32 %v315, %v440
        %442 = vdwg.mxu0
        %v443 = vtanh.pop %v404
        %v444 = vtanh.pop %v406
        %v445 = vtanh.pop %v409
        %v446 = vtanh.pop %v411
        %v447 = vtanh.pop %v414
        %v448 = vtanh.pop %v416
        %v449 = vtanh.pop %v419
        %v450 = vtanh.pop %v421
        %v451 = vtanh.pop %v424
        %v452 = vtanh.pop %v426
        %v453 = vtanh.pop %v429
        %v454 = vtanh.pop %v431
        %v455 = vtanh.pop %v434
        %v456 = vtanh.pop %v436
        %v457 = vtanh.pop %v439
        %v458 = vtanh.pop %v441
        %v459 = vld [vmem:[%s4] sm:$0xf]
        %v460 = vpack.c.bf16 %v444, %v443
        %v461 = vpack.c.bf16 %v446, %v445
        %v462 = vpack.c.bf16 %v448, %v447
        %v463 = vpack.c.bf16 %v450, %v449
        %v464 = vpack.c.bf16 %v452, %v451
        %v465 = vpack.c.bf16 %v454, %v453
        %v466 = vpack.c.bf16 %v456, %v455
        %v467 = vpack.c.bf16 %v458, %v457
        %v468 = vld [vmem:[%s5] sm:$0xff]
        %470 = vset.pattern.permute.xlu0 0
        %471 = vperm.xlu0 %470, %v468
        %v472 = vpop.permute.xlu0 %471
        %v475 = vsel %vm369, %v459, 0
        %v478 = vsel %vm369, %v460, 0
        %v481 = vsel %vm369, %v461, 0
        %v484 = vsel %vm369, %v462, 0
        %v487 = vsel %vm369, %v463, 0
        %v490 = vsel %vm369, %v464, 0
        %v493 = vsel %vm369, %v465, 0
        %v496 = vsel %vm369, %v466, 0
        %v499 = vsel %vm369, %v467, 0
        %501 = vmatpush.bf16.xpose.msra.mxu0 %v499
        %502 = vmatpush.bf16.xpose.msra.mxu0 %v496
        %503 = vmatpush.bf16.xpose.msra.mxu0 %v493
        %504 = vmatpush.bf16.xpose.msra.mxu0 %v490
        %505 = vmatpush.bf16.xpose.msra.mxu0 %v487
        %506 = vmatpush.bf16.xpose.msra.mxu0 %v484
        %507 = vmatpush.bf16.xpose.msra.mxu0 %v481
        %508 = vmatpush.bf16.xpose.msra.mxu0 %v478
        %509 = vmatmul.bf16.gmra.mxu0 %v475
        %v510 = vpop.f32.mrf.mxu0
        %v511 = vadd.f32 %v472, %v510
        %v512 = vpop.f32.mrf.mxu0
        %513 = vdwg.mxu0
        %514 = vst [vmem:[%s283] sm:$0x3] %v511
        %s515 = smul.u32 %s24, 128
        %s516 = sld [smem:[#allocation4 + %s515]]
        %s517 = sadd.s32 %s515, 1
        %s518 = sld [smem:[#allocation4 + %s517]]
        %v519 = vlaneseq
        %v520 = vshrl.u32 %v519, 7
        %vm521 = vcmp.eq.s32.totalorder %v520, 0
        %vm522 = vcmp.eq.s32.totalorder %v520, 1
        %v523 = vstv %s518
        %v524 = vsel %vm522, %v523, 4294967196
        %v525 = vstv %s516
        %v526 = vsel %vm521, %v525, %v524
        %v527 = vlaneseq
        %v528 = vand.u32 %v527, 127
        %529 = vmax.xlane.f32.xlu0 %v511
        %v530 = vpop.xlane.xlu0 %529
        %v531 = vsub.f32 %v511, %v530
        %v532 = vmul.f32 %v531, 1.442695
        %v533 = vpow.pop %v532
        %534 = vadd.xlane.f32.xlu0 %v533
        %v535 = vpop.xlane.xlu0 %534
        %v536 = vlog2.pop %v535
        %v537 = vmul.f32 %v536, 0.6931472
        %v538 = vadd.f32 %v530, %v537
        %vm539 = vcmp.eq.s32.totalorder %v528, %v526
        %v540 = vsel %vm539, %v511, 0.0
        %541 = vadd.xlane.f32.xlu0 %v540
        %v542 = vpop.xlane.xlu0 %541
        %vm543 = vcmp.ge.s32.totalorder %v526, 0
        %vm544 = vcmp.lt.s32.totalorder %v526, 128
        %vm545 = vmand %vm543, %vm544
        %v546 = vsel %vm545, 1, 0
        %v547 = vcvt.s32.f32 %v546
        %p548 = scmp.eq.s32.totalorder %s24, 0
        // Predicated region
        $region49: #{tpu_custom_call.1} parent=43 // pred_check
          %p549 = pneg %p548
        $region50: #{tpu_custom_call.1} parent=43 // pred_check_branch
          %551 = sbr.rel (%p549) target = $region52
        $region51: #{tpu_custom_call.1} parent=43 // pred_region
          %vm552 = vcmask 7168
          %553 = vst.msk [vmem:[#allocation2] sm:$0xff] %vm552, 0.0
          %554 = vst.msk [vmem:[#allocation3] sm:$0xff] %vm552, 0.0
        $region52: #{tpu_custom_call.1} parent=43 // pred_fallthru
          _
        %v555 = vld [vmem:[#allocation2] sm:$0xff]
        %v556 = vsub.f32 %v538, %v542
        %v557 = vmul.f32 %v547, %v556
        %v558 = vadd.f32 %v555, %v557
        %vm559 = vcmask 7168
        %560 = vst.msk [vmem:[#allocation2] sm:$0xff] %vm559, %v558
        %v561 = vld [vmem:[#allocation3] sm:$0xff]
        %v562 = vadd.f32 %v561, %v547
        %563 = vst.msk [vmem:[#allocation3] sm:$0xff] %vm559, %v562
        %p564 = scmp.eq.s32.totalorder %s24, 1
        // Predicated region
        $region53: #{tpu_custom_call.1} parent=43 // pred_check
          %p565 = pneg %p564
        $region54: #{tpu_custom_call.1} parent=43 // pred_check_branch
          %567 = sbr.rel (%p565) target = $region56
        $region55: #{tpu_custom_call.1} parent=43 // pred_region
          %v568 = vld [vmem:[#allocation2] sm:$0xff]
          %v569 = vld [vmem:[#allocation3] sm:$0xff]
          %v570 = vrcp.pop %v569
          %v571 = vmul.f32 %v569, %v570
          %v572 = vsub.f32 1.0, %v571
          %v573 = vmul.f32 %v570, %v572
          %v574 = vadd.f32 %v570, %v573
          %vm575 = vweird.f32 %v569
          %vm576 = vweird.f32 %v570
          %vm577 = vmor %vm575, %vm576
          %v578 = vsel %vm577, %v570, %v574
          %v579 = vand.u32 2147483647, %v569
          %vm580 = vcmp.eq.f32.partialorder %v579, 8.507059e+37
          %v581 = vand.u32 %v569, 2147483648
          %v582 = vor.u32 1.1754944e-38, %v581
          %v583 = vsel %vm580, %v582, %v578
          %v584 = vmul.f32 %v568, %v583
          %v586 = vrot.slane %v584, 1
          %v588 = vmul.f32 %v584, %v586
          %v589 = vrsqrt.pop %v588
          %v590 = vmul.f32 %v589, %v588
          %v591 = vmul.f32 %v590, %v589
          %v592 = vmul.f32 0.5, %v591
          %v593 = vsub.f32 1.5, %v592
          %v594 = vmul.f32 %v589, %v593
          %v595 = vmul.f32 %v588, %v594
          %vm596 = vcmp.eq.f32.partialorder %v588, inf
          %v597 = vsel %vm596, %v588, %v595
          %vm598 = vcmp.eq.f32.partialorder %v588, 0.0
          %v599 = vand.u32 %v588, 2147483648
          %v600 = vsel %vm598, %v599, %v597
          %vm601 = vcmask 0
          %602 = vst.msk [vmem:[#allocation8] sm:$0x1] %vm601, %v600
        $region56: #{tpu_custom_call.1} parent=43 // pred_fallthru
          _
        %s603 = sand.u32 %s163, 1
        %s604 = scalar_lea.sflag [#allocation5], %s603
        %s605 = sand.u32 %s163, 1
        %s606 = smul.addr %s605, 2
        %s607 = scalar_lea.vmem [#allocation7], %s606
        // Predicated region
        $region57: #{tpu_custom_call.1} parent=43 // pred_check
          %p608 = pneg %p173
        $region58: #{tpu_custom_call.1} parent=43 // pred_check_branch
          %610 = sbr.rel (%p608) target = $region60
        $region59: #{tpu_custom_call.1} parent=43 // pred_region
          %612 = vsyncadd %s604, 0
          %s613 = smul.addr %s24, 2
          %s614 = scalar_lea.hbm %s6, %s613
          %s616 = sshll.u32 %s607, 4
          %s617 = int_to_ptr.vmem [resolvable:$true] %s616
          %s618 = sshll.u32 %s614, 4
          %s619 = int_to_ptr.hbm [resolvable:$true] %s618
          %621 = dma.vmem_to_hbm [thread:$0]  %s617, 32, %s619, %s604
        $region60: #{tpu_custom_call.1} parent=43 // pred_fallthru
          _
        // Predicated region
        $region61: #{tpu_custom_call.1} parent=43 // pred_check
          %p622 = pneg %p194
        $region62: #{tpu_custom_call.1} parent=43 // pred_check_branch
          %624 = sbr.rel (%p622) target = $region64
        $region63: #{tpu_custom_call.1} parent=43 // pred_region
          %626 = vsyncadd [#allocation9], 0
          %s628 = sshll.u32 [#allocation8], 4
          %s629 = int_to_ptr.vmem [resolvable:$true] %s628
          %s630 = sshll.u32 %s7, 4
          %s631 = int_to_ptr.hbm [resolvable:$true] %s630
          %633 = dma.vmem_to_hbm [thread:$0]  %s629, 16, %s631, [#allocation9]
        $region64: #{tpu_custom_call.1} parent=43 // pred_fallthru
          _
        // Predicated region
        $region65: #{tpu_custom_call.1} parent=43 // pred_check
          %p634 = pneg %p194
        $region66: #{tpu_custom_call.1} parent=43 // pred_check_branch
          %636 = sbr.rel (%p634) target = $region68
        $region67: #{tpu_custom_call.1} parent=43 // pred_region
          %638 = dma.done [#allocation9], 16
        $region68: #{tpu_custom_call.1} parent=43 // pred_fallthru
          _
      $region44: #{tpu_custom_call.1} parent=5 // pred_fallthru
        _
      %p639 = scmp.le.s32.totalorder 2, %s19
      // Predicated region
      $region69: #{tpu_custom_call.1} parent=5 // pred_check
        %p640 = pneg %p639
      $region70: #{tpu_custom_call.1} parent=5 // pred_check_branch
        %642 = sbr.rel (%p640) target = $region72
      $region71: #{tpu_custom_call.1} parent=5 // pred_region
        %s643 = ssub.s32 %s19, 2
        // Predicated region
        $region73: #{tpu_custom_call.1} parent=71 // pred_check
          %p644 = pneg %p179
        $region74: #{tpu_custom_call.1} parent=71 // pred_check_branch
          %646 = sbr.rel (%p644) target = $region76
        $region75: #{tpu_custom_call.1} parent=71 // pred_region
          %s647 = sand.u32 %s164, 1
          %s648 = scalar_lea.sflag [#allocation5], %s647
          %s649 = sand.u32 %s164, 1
          %s650 = smul.addr %s649, 2
          %s651 = scalar_lea.vmem [#allocation7], %s650
          %653 = dma.done %s648, 32
        $region76: #{tpu_custom_call.1} parent=71 // pred_fallthru
          _
      $region72: #{tpu_custom_call.1} parent=5 // pred_fallthru
        _
    $region6: #{tpu_custom_call.1} parent=1 // loop_footer
      %s23 = sadd.s32 1, %s19
    $region7: #{tpu_custom_call.1} parent=1 // loop_footer_branch
      %18 = sbr.rel target = $region3
    $region8: #{tpu_custom_call.1} parent=1 // loop_exit
      _
    %654 = vsyncpa [#allocation5], 1
    %s655 = scalar_lea.sflag [#allocation5], 1
    %656 = vsyncpa %s655, 1
    %657 = vsyncpa [#allocation9], 1
    %658 = vsyncpa [#allocation6], 1
    %s659 = scalar_lea.sflag [#allocation6], 1
    %660 = vsyncpa %s659, 1

</llo_original>
